<compile_context>
chip_gen: v5e
topology: v5e:2x2
jax: 0.10.0
libtpu: 0.0.40
codegen_flags: <defaults>
</compile_context>

<pallas_src>
import functools
import math

import jax
import jax.numpy as jnp
from jax.experimental import pallas as pl
from jax.experimental.pallas import tpu as pltpu


def _leaky_relu(x, slope=0.01):
    return jnp.where(x > 0, x, slope * x)


def fused_hnet2_kernel(x_ref, w1_ref, b1_ref, w2_ref, b2_ref, w3_ref, b3_ref,
                       out_ref, *, n):
    """fc1 -> LeakyReLU -> fc2 -> LeakyReLU -> fc3 -> per-group softmax.

    Dropout layers are inference-mode identities.
    # TODO(synk): training-mode stochastic dropout (p=0.5) omitted; this is the
    #             deterministic eval-mode forward only.
    """
    tile_n = x_ref.shape[0]
    g_tile = tile_n // n
    cdt = w1_ref.dtype                  # matmul operand dtype (bf16 by default)

    # fc1 / fc2 on the MXU with f32 accumulation; bias + LeakyReLU in f32.
    x = x_ref[...]                                                       # (tile_n, D), already cdt
    h1 = jnp.dot(x, w1_ref[...], preferred_element_type=jnp.float32) + b1_ref[...]
    h1 = _leaky_relu(h1)                                                 # (tile_n, 512) f32
    h2 = jnp.dot(h1.astype(cdt), w2_ref[...],
                 preferred_element_type=jnp.float32) + b2_ref[...]
    h2 = _leaky_relu(h2)                                                 # (tile_n, 128) f32

    # fc3: output width 1 would waste 127/128 of the MXU, so do it on the
    # VPU/XLU (multiply + lane reduce).  Fuse the per-group regrouping into the
    # reduction: split the leading (row) axis only -- the minor (lane) dim is
    # unchanged, so the reshape is layout-free -- and reduce lanes to (g_tile, n).
    p = h2 * w3_ref[...]                                                 # (tile_n, H2) f32, VPU
    zg = jnp.sum(p.reshape(g_tile, n, p.shape[-1]), axis=-1) + b3_ref[...]   # (g_tile, n)

    # Grouped softmax over the last axis (all f32); exact divide (tiny tensor).
    m = jnp.max(zg, axis=-1, keepdims=True)
    e = jnp.exp(zg - m)
    s = jnp.sum(e, axis=-1, keepdims=True)
    out_ref[...] = (e / s).astype(out_ref.dtype)                         # (g_tile, n)


def _choose_row_tile(n_rows_padded, n, max_rows, min_steps=4):
    """Largest multiple of 8*n that divides n_rows_padded and is <= max_rows,
    while keeping at least `min_steps` grid steps when the batch is big enough
    (v7x dual-TC sharding + pipeline overlap)."""
    base = 8 * n
    max_rows = max(base, (max_rows // base) * base)
    target_steps = min(min_steps, n_rows_padded // base)
    best = base
    t = base
    limit = min(max_rows, n_rows_padded)
    while t <= limit:
        if n_rows_padded % t == 0 and (n_rows_padded // t) >= target_steps:
            best = t
        t += base
    return best


def hnet2_forward(x, params, n=8, compute_dtype=jnp.bfloat16, max_tile_rows=2048):
    """Pallas implementation of HNet2.forward (eval mode). Returns (N//n, n) f32."""
    w1, b1, w2, b2, w3, b3 = params
    N, D = x.shape
    assert N % n == 0, "number of rows must be divisible by num_per_group"
    H1 = w1.shape[1]
    H2 = w2.shape[1]
    G = N // n

    # Pad rows to a multiple of 8*n: padded (zero) rows form whole extra groups
    # that are sliced off below, so tiles stay (8,128)-aligned and we never fall
    # back to a single full-array block for awkward batch sizes.
    base = 8 * n
    N_pad = ((N + base - 1) // base) * base
    if N_pad != N:
        x = jnp.pad(x, ((0, N_pad - N), (0, 0)))
    G_pad = N_pad // n

    tile_n = _choose_row_tile(N_pad, n, max_tile_rows)
    g_tile = tile_n // n
    grid = (N_pad // tile_n,)

    # Matmul operands in compute_dtype (bf16 = native MXU path on v5e/v6e/v7x);
    # x is cast here so its HBM traffic and double-buffered VMEM halve too.
    xc = x.astype(compute_dtype)
    w1c = w1.astype(compute_dtype)
    w2c = w2.astype(compute_dtype)
    # fc3 weight laid out as a (1, H2) f32 row for the VPU reduction.
    w3_row = w3.reshape(1, H2).astype(jnp.float32)

    kernel = functools.partial(fused_hnet2_kernel, n=n)

    # Per-tile VMEM @ tile_n=2048 (bf16 operands): x 2x128 KiB + h1 f32 4 MiB +
    # h1 bf16 2 MiB + h2 1 MiB + fc3 product 1 MiB + resident weights ~0.4 MiB
    # (double-buffered)  ~= 9-10 MiB, comfortably under the 48 MiB scoped limit
    # below on every generation (v7x physical VMEM is 64 MiB/TC).
    # Note: weight/bias specs could be single-buffered (pipeline_mode) but the
    # saving is ~0.2 MiB, so default double-buffering is kept for robustness.
    return pl.pallas_call(
        kernel,
        out_shape=jax.ShapeDtypeStruct((G_pad, n), jnp.float32),
        grid=grid,
        in_specs=[
            pl.BlockSpec((tile_n, D), lambda i: (i, 0)),   # x: tiled over rows
            pl.BlockSpec((D, H1), lambda i: (0, 0)),       # weights/biases VMEM-resident
            pl.BlockSpec((1, H1), lambda i: (0, 0)),
            pl.BlockSpec((H1, H2), lambda i: (0, 0)),
            pl.BlockSpec((1, H2), lambda i: (0, 0)),
            pl.BlockSpec((1, H2), lambda i: (0, 0)),
            pl.BlockSpec((1, 1), lambda i: (0, 0)),
        ],
        out_specs=pl.BlockSpec((g_tile, n), lambda i: (i, 0)),
        compiler_params=pltpu.CompilerParams(
            dimension_semantics=("parallel",),       # shard row tiles across TCs (v7x)
            vmem_limit_bytes=48 * 1024 * 1024,       # > v5e 16 MiB default, < v7x 64 MiB physical
        ),
    )(xc, w1c, b1, w2c, b2, w3_row, b3)[:G]


# ----------------------------------------------------------------------------
# Deterministic parameter init (PyTorch nn.Linear-style uniform bounds).
# ----------------------------------------------------------------------------
def init_params(key, input_dim):
    def linear(key, fan_in, fan_out):
        kw, kb = jax.random.split(key)
        bound = 1.0 / math.sqrt(fan_in)
        w = jax.random.uniform(kw, (fan_in, fan_out), jnp.float32, -bound, bound)
        b = jax.random.uniform(kb, (1, fan_out), jnp.float32, -bound, bound)
        return w, b

    k1, k2, k3 = jax.random.split(key, 3)
    w1, b1 = linear(k1, input_dim, 512)
    w2, b2 = linear(k2, 512, 128)
    w3, b3 = linear(k3, 128, 1)
    return (w1, b1, w2, b2, w3, b3)


def reference_forward(x, params, n=8):
    """Plain-JAX reference for sanity checking."""
    w1, b1, w2, b2, w3, b3 = params
    h1 = _leaky_relu(x @ w1 + b1)
    h2 = _leaky_relu(h1 @ w2 + b2)
    z3 = (h2 @ w3 + b3).reshape(-1, n)
    return jax.nn.softmax(z3, axis=1)


if __name__ == "__main__":
    input_dim = 32
    n = 8          # num_per_group
    N = 16         # rows (2 groups of 8)

    key = jax.random.PRNGKey(0)
    kx, kp, kx2, kx3 = jax.random.split(key, 4)
    x = jax.random.normal(kx, (N, input_dim), dtype=jnp.float32)
    params = init_params(kp, input_dim)

    # Default (bf16 MXU operands) path; rows zero-padded 16 -> 64 internally.
    out = jax.block_until_ready(hnet2_forward(x, params, n=n))
    ref = reference_forward(x, params, n=n)
    assert out.shape == (N // n, n)
    assert jnp.allclose(out, ref, atol=5e-2), "bf16 mismatch vs reference"
    assert jnp.allclose(jnp.sum(out, axis=1), 1.0, atol=1e-3), "softmax rows must sum to 1"

    # Multi-tile grid path (grid of 4 row tiles; weights stay VMEM-resident)
    # with explicit f32 operands for a tight numerical check.
    N2 = 256
    x2 = jax.random.normal(kx2, (N2, input_dim), dtype=jnp.float32)
    out2 = jax.block_until_ready(
        hnet2_forward(x2, params, n=n, compute_dtype=jnp.float32, max_tile_rows=64))
    ref2 = reference_forward(x2, params, n=n)
    assert out2.shape == (N2 // n, n)
    assert jnp.allclose(out2, ref2, atol=2e-3, rtol=2e-3), "f32 tiled mismatch vs reference"

    # Awkward batch (multiple of n=8 but not of 8*n=64): exercises the
    # zero-pad + slice path on the default bf16 configuration.
    N3 = 200
    x3 = jax.random.normal(kx3, (N3, input_dim), dtype=jnp.float32)
    out3 = jax.block_until_ready(hnet2_forward(x3, params, n=n))
    ref3 = reference_forward(x3, params, n=n)
    assert out3.shape == (N3 // n, n)
    assert jnp.allclose(out3, ref3, atol=5e-2), "padded-batch mismatch vs reference"

    print("KERNEL_OK")
</pallas_src>

<mosaic_0001>
module attributes {stable_mosaic.version = 11 : i64} {
  func.func @fused_hnet2_kernel(%arg0: i32, %arg1: memref<64x32xbf16, #tpu.memory_space<vmem>>, %arg2: memref<32x512xbf16, #tpu.memory_space<vmem>>, %arg3: memref<1x512xf32, #tpu.memory_space<vmem>>, %arg4: memref<512x128xbf16, #tpu.memory_space<vmem>>, %arg5: memref<1x128xf32, #tpu.memory_space<vmem>>, %arg6: memref<1x128xf32, #tpu.memory_space<vmem>>, %arg7: memref<1x1xf32, #tpu.memory_space<vmem>>, %arg8: memref<8x8xf32, #tpu.memory_space<vmem>>) attributes {dimension_semantics = [#tpu.dimension_semantics<parallel>], iteration_bounds = array<i64: 1>, scalar_prefetch = 0 : i64, scratch_operands = 0 : i64, tpu.core_type = #tpu.core_type<tc>, window_params = [{transform_indices = @transform_0, window_bounds = array<i64: 64, 32>}, {pipeline_mode = #tpu.pipeline_mode<synchronous>, transform_indices = @transform_1, window_bounds = array<i64: 32, 512>}, {pipeline_mode = #tpu.pipeline_mode<synchronous>, transform_indices = @transform_2, window_bounds = array<i64: 1, 512>}, {pipeline_mode = #tpu.pipeline_mode<synchronous>, transform_indices = @transform_3, window_bounds = array<i64: 512, 128>}, {pipeline_mode = #tpu.pipeline_mode<synchronous>, transform_indices = @transform_4, window_bounds = array<i64: 1, 128>}, {pipeline_mode = #tpu.pipeline_mode<synchronous>, transform_indices = @transform_5, window_bounds = array<i64: 1, 128>}, {pipeline_mode = #tpu.pipeline_mode<synchronous>, transform_indices = @transform_6, window_bounds = array<i64: 1, 1>}, {transform_indices = @transform_7, window_bounds = array<i64: 8, 8>}]} {
    %c0 = arith.constant 0 : index
    %c0_0 = arith.constant 0 : index
    %0 = vector.load %arg1[%c0, %c0_0] : memref<64x32xbf16, #tpu.memory_space<vmem>>, vector<64x32xbf16>
    %c0_1 = arith.constant 0 : index
    %c0_2 = arith.constant 0 : index
    %1 = vector.load %arg2[%c0_1, %c0_2] : memref<32x512xbf16, #tpu.memory_space<vmem>>, vector<32x512xbf16>
    %cst = arith.constant dense<0.000000e+00> : vector<64x512xf32>
    %2 = tpu.matmul %0, %1, %cst {dimension_numbers = #tpu.dot_dimension_numbers<[1], [0], [0], [1], [0, 0, 1, 1], [], []>} : vector<64x32xbf16>, vector<32x512xbf16>, vector<64x512xf32> -> vector<64x512xf32>
    %c0_3 = arith.constant 0 : index
    %c0_4 = arith.constant 0 : index
    %3 = vector.load %arg3[%c0_3, %c0_4] : memref<1x512xf32, #tpu.memory_space<vmem>>, vector<1x512xf32>
    %4 = vector.broadcast %3 : vector<1x512xf32> to vector<64x512xf32>
    %5 = arith.addf %2, %4 : vector<64x512xf32>
    %cst_5 = arith.constant 0.000000e+00 : f32
    %6 = vector.broadcast %cst_5 : f32 to vector<64x512xf32>
    %7 = arith.cmpf ogt, %5, %6 : vector<64x512xf32>
    %cst_6 = arith.constant 0.00999999977 : f32
    %8 = vector.broadcast %cst_6 : f32 to vector<64x512xf32>
    %9 = arith.mulf %8, %5 : vector<64x512xf32>
    %10 = arith.select %7, %5, %9 : vector<64x512xi1>, vector<64x512xf32>
    %11 = arith.truncf %10 : vector<64x512xf32> to vector<64x512xbf16>
    %c0_7 = arith.constant 0 : index
    %c0_8 = arith.constant 0 : index
    %12 = vector.load %arg4[%c0_7, %c0_8] : memref<512x128xbf16, #tpu.memory_space<vmem>>, vector<512x128xbf16>
    %cst_9 = arith.constant dense<0.000000e+00> : vector<64x128xf32>
    %13 = tpu.matmul %11, %12, %cst_9 {dimension_numbers = #tpu.dot_dimension_numbers<[1], [0], [0], [1], [0, 0, 1, 1], [], []>} : vector<64x512xbf16>, vector<512x128xbf16>, vector<64x128xf32> -> vector<64x128xf32>
    %c0_10 = arith.constant 0 : index
    %c0_11 = arith.constant 0 : index
    %14 = vector.load %arg5[%c0_10, %c0_11] : memref<1x128xf32, #tpu.memory_space<vmem>>, vector<1x128xf32>
    %15 = vector.broadcast %14 : vector<1x128xf32> to vector<64x128xf32>
    %16 = arith.addf %13, %15 : vector<64x128xf32>
    %cst_12 = arith.constant 0.000000e+00 : f32
    %17 = vector.broadcast %cst_12 : f32 to vector<64x128xf32>
    %18 = arith.cmpf ogt, %16, %17 : vector<64x128xf32>
    %cst_13 = arith.constant 0.00999999977 : f32
    %19 = vector.broadcast %cst_13 : f32 to vector<64x128xf32>
    %20 = arith.mulf %19, %16 : vector<64x128xf32>
    %21 = arith.select %18, %16, %20 : vector<64x128xi1>, vector<64x128xf32>
    %c0_14 = arith.constant 0 : index
    %c0_15 = arith.constant 0 : index
    %22 = vector.load %arg6[%c0_14, %c0_15] : memref<1x128xf32, #tpu.memory_space<vmem>>, vector<1x128xf32>
    %23 = vector.broadcast %22 : vector<1x128xf32> to vector<64x128xf32>
    %24 = arith.mulf %21, %23 : vector<64x128xf32>
    %25 = vector.shape_cast %24 : vector<64x128xf32> to vector<8x8x128xf32>
    %cst_16 = arith.constant dense<0.000000e+00> : vector<8x8xf32>
    %26 = vector.multi_reduction <add>, %25, %cst_16 [2] : vector<8x8x128xf32> to vector<8x8xf32>
    %c0_17 = arith.constant 0 : index
    %c0_18 = arith.constant 0 : index
    %27 = vector.load %arg7[%c0_17, %c0_18] : memref<1x1xf32, #tpu.memory_space<vmem>>, vector<1x1xf32>
    %28 = vector.broadcast %27 : vector<1x1xf32> to vector<8x8xf32>
    %29 = arith.addf %26, %28 : vector<8x8xf32>
    %cst_19 = arith.constant dense<0xFF800000> : vector<8xf32>
    %30 = vector.multi_reduction <maximumf>, %29, %cst_19 [1] : vector<8x8xf32> to vector<8xf32>
    %31 = vector.shape_cast %30 : vector<8xf32> to vector<8x1xf32>
    %32 = vector.broadcast %31 : vector<8x1xf32> to vector<8x8xf32>
    %33 = arith.subf %29, %32 : vector<8x8xf32>
    %34 = math.exp %33 : vector<8x8xf32>
    %cst_20 = arith.constant dense<0.000000e+00> : vector<8xf32>
    %35 = vector.multi_reduction <add>, %34, %cst_20 [1] : vector<8x8xf32> to vector<8xf32>
    %36 = vector.shape_cast %35 : vector<8xf32> to vector<8x1xf32>
    %37 = vector.broadcast %36 : vector<8x1xf32> to vector<8x8xf32>
    %38 = arith.divf %34, %37 : vector<8x8xf32>
    %c0_21 = arith.constant 0 : index
    %c0_22 = arith.constant 0 : index
    %39 = vector.load %arg8[%c0_21, %c0_22] : memref<8x8xf32, #tpu.memory_space<vmem>>, vector<8x8xf32>
    tpu.vector_store %arg8[%c0_21, %c0_22], %38 {strides = array<i32>} : memref<8x8xf32, #tpu.memory_space<vmem>>, vector<8x8xf32>,
    return
  }
  func.func @transform_0(%arg0: i32) -> (i32, i32) {
    %c0_i32 = arith.constant 0 : i32
    %c0_i32_0 = arith.constant 0 : i32
    return %arg0, %c0_i32 : i32, i32
  }
  func.func @transform_1(%arg0: i32) -> (i32, i32) {
    %c0_i32 = arith.constant 0 : i32
    %c0_i32_0 = arith.constant 0 : i32
    %c0_i32_1 = arith.constant 0 : i32
    return %c0_i32, %c0_i32_0 : i32, i32
  }
  func.func @transform_2(%arg0: i32) -> (i32, i32) {
    %c0_i32 = arith.constant 0 : i32
    %c0_i32_0 = arith.constant 0 : i32
    %c0_i32_1 = arith.constant 0 : i32
    return %c0_i32, %c0_i32_0 : i32, i32
  }
  func.func @transform_3(%arg0: i32) -> (i32, i32) {
    %c0_i32 = arith.constant 0 : i32
    %c0_i32_0 = arith.constant 0 : i32
    %c0_i32_1 = arith.constant 0 : i32
    return %c0_i32, %c0_i32_0 : i32, i32
  }
  func.func @transform_4(%arg0: i32) -> (i32, i32) {
    %c0_i32 = arith.constant 0 : i32
    %c0_i32_0 = arith.constant 0 : i32
    %c0_i32_1 = arith.constant 0 : i32
    return %c0_i32, %c0_i32_0 : i32, i32
  }
  func.func @transform_5(%arg0: i32) -> (i32, i32) {
    %c0_i32 = arith.constant 0 : i32
    %c0_i32_0 = arith.constant 0 : i32
    %c0_i32_1 = arith.constant 0 : i32
    return %c0_i32, %c0_i32_0 : i32, i32
  }
  func.func @transform_6(%arg0: i32) -> (i32, i32) {
    %c0_i32 = arith.constant 0 : i32
    %c0_i32_0 = arith.constant 0 : i32
    %c0_i32_1 = arith.constant 0 : i32
    return %c0_i32, %c0_i32_0 : i32, i32
  }
  func.func @transform_7(%arg0: i32) -> (i32, i32) {
    %c0_i32 = arith.constant 0 : i32
    %c0_i32_0 = arith.constant 0 : i32
    return %arg0, %c0_i32 : i32, i32
  }
}

</mosaic_0001>

<llo_original>
// kernel: tpu_custom_call.1
$region0: #{tpu_custom_call.1}
  #allocation0 [shape = 'u32[]', space=smem, size = 0x4, offset = 0x4, fixed_abs, tag = 'smem constant byte address 0x4 - core index']
  #allocation1 [shape = 'u32[72,128]{1,0:T(1,128)}', space=vmem, size = 0x9000, scoped, tag = 'internal scratch']
  #allocation2 [shape = 'f32[1,1]{1,0:T(1,128)S(1)}', space=vmem, size = 0x200, scoped, tag = 'scoped memory for tpu_custom_call.1']
  %s0 = inlined_call_operand.vmem [shape: bf16[64,32], index: 0, kind: input, shape index: {}]
  %s1 = inlined_call_operand.hbm [shape: bf16[32,512], index: 1, kind: input, shape index: {}]
  %s2 = inlined_call_operand.vmem [shape: f32[1,512], index: 2, kind: input, shape index: {}]
  %s3 = inlined_call_operand.hbm [shape: bf16[512,128], index: 3, kind: input, shape index: {}]
  %s4 = inlined_call_operand.vmem [shape: f32[1,128], index: 4, kind: input, shape index: {}]
  %s5 = inlined_call_operand.vmem [shape: f32[1,128], index: 5, kind: input, shape index: {}]
  %s6 = inlined_call_operand.<no memory space> [shape: f32[1,1], index: 6, kind: input, shape index: {}]
  %s7 = inlined_call_operand.hbm [shape: f32[8,8], index: 7, kind: output, shape index: {}]
  %s8 = sld [smem:[#allocation0]]
  $region46: #{tpu_custom_call.1} parent=0
    _
  %s10 = ssub.s32 1, %s8
  %s11 = scalar_select 0, %s10, %s8
  %v12 = vstv %s6
  %13 = vst [vmem:[#allocation2] sm:$0x1] %v12
  $region1: #{tpu_custom_call.1} parent=0
    #allocation3 [shape = 'u8[32768]{0}', space=vmem, size = 0x8000, scoped, tag = 'input window, operand 1, single buffered']
    #allocation4 [shape = 's32[1]{0}', space=sflag, size = 0x4, scoped, tag = 'scoped memory for tpu_custom_call.1']
    #allocation5 [shape = 's32[1]{0}', space=sflag, size = 0x4, scoped, tag = 'scoped memory for tpu_custom_call.1']
    #allocation6 [shape = 'u8[131072]{0}', space=vmem, size = 0x20000, scoped, tag = 'input window, operand 3, single buffered']
    #allocation7 [shape = 's32[1]{0}', space=sflag, size = 0x4, scoped, tag = 'scoped memory for tpu_custom_call.1']
    #allocation8 [shape = 'u8[4096]{0}', space=vmem, size = 0x1000, scoped, tag = 'output window, operand 0, single buffered']
    %14 = vsyncpa [#allocation4], 0
    %15 = vsyncpa [#allocation7], 0
    %16 = vsyncpa [#allocation5], 0
    // Predicated region
    $region2: #{tpu_custom_call.1} parent=1 // pred_check
      _
    $region3: #{tpu_custom_call.1} parent=1 // pred_check_branch
      %18 = sbr.rel (0) target = $region5
    $region4: #{tpu_custom_call.1} parent=1 // pred_region
      _
    $region5: #{tpu_custom_call.1} parent=1 // pred_fallthru
      _
    // Predicated region
    $region6: #{tpu_custom_call.1} parent=1 // pred_check
      _
    $region7: #{tpu_custom_call.1} parent=1 // pred_check_branch
      %20 = sbr.rel (0) target = $region9
    $region8: #{tpu_custom_call.1} parent=1 // pred_region
      %22 = vsyncadd [#allocation4], 0
      %s23 = sshll.u32 %s1, 4
      %s24 = int_to_ptr.hbm [resolvable:$true] %s23
      %s25 = sshll.u32 [#allocation3], 4
      %s26 = int_to_ptr.vmem [resolvable:$true] %s25
      %31 = dma.hbm_to_vmem [thread:$0]  %s24, 1024, %s26, [#allocation4], 256, 256, 16
    $region9: #{tpu_custom_call.1} parent=1 // pred_fallthru
      _
    // Predicated region
    $region10: #{tpu_custom_call.1} parent=1 // pred_check
      _
    $region11: #{tpu_custom_call.1} parent=1 // pred_check_branch
      %33 = sbr.rel (0) target = $region13
    $region12: #{tpu_custom_call.1} parent=1 // pred_region
      _
    $region13: #{tpu_custom_call.1} parent=1 // pred_fallthru
      _
    // Predicated region
    $region14: #{tpu_custom_call.1} parent=1 // pred_check
      _
    $region15: #{tpu_custom_call.1} parent=1 // pred_check_branch
      %35 = sbr.rel (0) target = $region17
    $region16: #{tpu_custom_call.1} parent=1 // pred_region
      %37 = vsyncadd [#allocation7], 0
      %s38 = sshll.u32 %s3, 4
      %s39 = int_to_ptr.hbm [resolvable:$true] %s38
      %s40 = sshll.u32 [#allocation6], 4
      %s41 = int_to_ptr.vmem [resolvable:$true] %s40
      %46 = dma.hbm_to_vmem [thread:$0]  %s39, 4096, %s41, [#allocation7], 64, 64, 4
    $region17: #{tpu_custom_call.1} parent=1 // pred_fallthru
      _
    // Predicated region
    $region18: #{tpu_custom_call.1} parent=1 // pred_check
      _
    $region19: #{tpu_custom_call.1} parent=1 // pred_check_branch
      %48 = sbr.rel (0) target = $region21
    $region20: #{tpu_custom_call.1} parent=1 // pred_region
      _
    $region21: #{tpu_custom_call.1} parent=1 // pred_fallthru
      _
    // Predicated region
    $region22: #{tpu_custom_call.1} parent=1 // pred_check
      _
    $region23: #{tpu_custom_call.1} parent=1 // pred_check_branch
      %50 = sbr.rel (0) target = $region25
    $region24: #{tpu_custom_call.1} parent=1 // pred_region
      _
    $region25: #{tpu_custom_call.1} parent=1 // pred_fallthru
      _
    // Predicated region
    $region26: #{tpu_custom_call.1} parent=1 // pred_check
      _
    $region27: #{tpu_custom_call.1} parent=1 // pred_check_branch
      %52 = sbr.rel (0) target = $region29
    $region28: #{tpu_custom_call.1} parent=1 // pred_region
      _
    $region29: #{tpu_custom_call.1} parent=1 // pred_fallthru
      _
    // Predicated region
    $region30: #{tpu_custom_call.1} parent=1 // pred_check
      _
    $region31: #{tpu_custom_call.1} parent=1 // pred_check_branch
      %54 = sbr.rel (0) target = $region33
    $region32: #{tpu_custom_call.1} parent=1 // pred_region
      %56 = dma.done [#allocation4], 1024
    $region33: #{tpu_custom_call.1} parent=1 // pred_fallthru
      _
    // Predicated region
    $region34: #{tpu_custom_call.1} parent=1 // pred_check
      _
    $region35: #{tpu_custom_call.1} parent=1 // pred_check_branch
      %58 = sbr.rel (0) target = $region37
    $region36: #{tpu_custom_call.1} parent=1 // pred_region
      %60 = dma.done [#allocation7], 4096
    $region37: #{tpu_custom_call.1} parent=1 // pred_fallthru
      _
    %v62 = vld [vmem:[%s0] sm:$0xf]
    %v63 = vld [vmem:[%s0 + $0x4] sm:$0xf]
    %v64 = vld [vmem:[%s0 + $0x8] sm:$0xf]
    %v65 = vld [vmem:[%s0 + $0xc] sm:$0xf]
    %v66 = vld [vmem:[%s0 + $0x10] sm:$0xf]
    %v67 = vld [vmem:[%s0 + $0x14] sm:$0xf]
    %v68 = vld [vmem:[%s0 + $0x18] sm:$0xf]
    %v69 = vld [vmem:[%s0 + $0x1c] sm:$0xf]
    %v70 = vld [vmem:[#allocation3] sm:$0xff]
    %v71 = vld [vmem:[#allocation3 + $0x8] sm:$0xff]
    %v72 = vld [vmem:[#allocation3 + $0x10] sm:$0xff]
    %v73 = vld [vmem:[#allocation3 + $0x18] sm:$0xff]
    %v74 = vld [vmem:[#allocation3 + $0x20] sm:$0xff]
    %v75 = vld [vmem:[#allocation3 + $0x28] sm:$0xff]
    %v76 = vld [vmem:[#allocation3 + $0x30] sm:$0xff]
    %v77 = vld [vmem:[#allocation3 + $0x38] sm:$0xff]
    %v78 = vld [vmem:[%s2] sm:$0xf]
    %v80 = vperm.slane %v78, 0
    %v81 = vperm.slane %v78, 1
    %v82 = vperm.slane %v78, 2
    %v83 = vperm.slane %v78, 3
    %v96 = vunpack.c.l.b16 %v62
    %v97 = vunpack.c.l.b16 %v63
    %v98 = vunpack.c.l.b16 %v64
    %v99 = vunpack.c.l.b16 %v65
    %v100 = vunpack.c.l.b16 %v66
    %v101 = vunpack.c.l.b16 %v67
    %v102 = vunpack.c.l.b16 %v68
    %v103 = vunpack.c.l.b16 %v69
    %v104 = vpack.c.b16 %v97, %v96
    %v105 = vpack.c.b16 %v99, %v98
    %v106 = vpack.c.b16 %v101, %v100
    %v107 = vpack.c.b16 %v103, %v102
    %v116 = vunpack.c.l.b16 %v70
    %v117 = vunpack.c.h.b16 %v70
    %v118 = vunpack.c.l.b16 %v71
    %v119 = vunpack.c.h.b16 %v71
    %v120 = vunpack.c.l.b16 %v72
    %v121 = vunpack.c.h.b16 %v72
    %v122 = vunpack.c.l.b16 %v73
    %v123 = vunpack.c.h.b16 %v73
    %v124 = vunpack.c.l.b16 %v74
    %v125 = vunpack.c.h.b16 %v74
    %v126 = vunpack.c.l.b16 %v75
    %v127 = vunpack.c.h.b16 %v75
    %v128 = vunpack.c.l.b16 %v76
    %v129 = vunpack.c.h.b16 %v76
    %v130 = vunpack.c.l.b16 %v77
    %v131 = vunpack.c.h.b16 %v77
    %v132 = vpack.c.b16 %v120, %v116
    %v133 = vpack.c.b16 %v121, %v117
    %v134 = vpack.c.b16 %v122, %v118
    %v135 = vpack.c.b16 %v123, %v119
    %v136 = vpack.c.b16 %v128, %v124
    %v137 = vpack.c.b16 %v129, %v125
    %v138 = vpack.c.b16 %v130, %v126
    %v139 = vpack.c.b16 %v131, %v127
    %vm148 = vcmask 261120
    %v150 = vsel %vm148, %v104, 0
    %v153 = vsel %vm148, %v105, 0
    %v156 = vsel %vm148, %v106, 0
    %v159 = vsel %vm148, %v107, 0
    %161 = vmatpush.bf16.msra.mxu0 0
    %162 = vmatpush.bf16.msra.mxu0 0
    %163 = vmatpush.bf16.msra.mxu0 0
    %164 = vmatpush.bf16.msra.mxu0 0
    %165 = vmatpush.bf16.msra.mxu0 0
    %166 = vmatpush.bf16.msra.mxu0 0
    %167 = vmatpush.bf16.msra.mxu0 %v136
    %168 = vmatpush.bf16.msra.mxu0 %v132
    %169 = vmatmul.bf16.gmra.mxu0 %v150
    %v170 = vpop.f32.mrf.mxu0
    %v171 = vadd.f32 %v80, %v170
    %v172 = vpop.f32.mrf.mxu0
    %v173 = vadd.f32 %v80, %v172
    %174 = vmatmul.bf16.gmra.mxu0 %v153
    %v175 = vpop.f32.mrf.mxu0
    %v176 = vadd.f32 %v80, %v175
    %v177 = vpop.f32.mrf.mxu0
    %v178 = vadd.f32 %v80, %v177
    %179 = vmatmul.bf16.gmra.mxu0 %v156
    %v180 = vpop.f32.mrf.mxu0
    %v181 = vadd.f32 %v80, %v180
    %v182 = vpop.f32.mrf.mxu0
    %v183 = vadd.f32 %v80, %v182
    %184 = vmatmul.bf16.gmra.mxu0 %v159
    %v185 = vpop.f32.mrf.mxu0
    %v186 = vadd.f32 %v80, %v185
    %v187 = vpop.f32.mrf.mxu0
    %v188 = vadd.f32 %v80, %v187
    %189 = vdwg.mxu0
    %190 = vmatpush.bf16.msra.mxu0 0
    %191 = vmatpush.bf16.msra.mxu0 0
    %192 = vmatpush.bf16.msra.mxu0 0
    %193 = vmatpush.bf16.msra.mxu0 0
    %194 = vmatpush.bf16.msra.mxu0 0
    %195 = vmatpush.bf16.msra.mxu0 0
    %196 = vmatpush.bf16.msra.mxu0 %v137
    %197 = vmatpush.bf16.msra.mxu0 %v133
    %198 = vmatmul.bf16.gmra.mxu0 %v150
    %v199 = vpop.f32.mrf.mxu0
    %v200 = vadd.f32 %v81, %v199
    %v201 = vpop.f32.mrf.mxu0
    %v202 = vadd.f32 %v81, %v201
    %203 = vmatmul.bf16.gmra.mxu0 %v153
    %v204 = vpop.f32.mrf.mxu0
    %v205 = vadd.f32 %v81, %v204
    %v206 = vpop.f32.mrf.mxu0
    %v207 = vadd.f32 %v81, %v206
    %208 = vmatmul.bf16.gmra.mxu0 %v156
    %v209 = vpop.f32.mrf.mxu0
    %v210 = vadd.f32 %v81, %v209
    %v211 = vpop.f32.mrf.mxu0
    %v212 = vadd.f32 %v81, %v211
    %213 = vmatmul.bf16.gmra.mxu0 %v159
    %v214 = vpop.f32.mrf.mxu0
    %v215 = vadd.f32 %v81, %v214
    %v216 = vpop.f32.mrf.mxu0
    %v217 = vadd.f32 %v81, %v216
    %218 = vdwg.mxu0
    %219 = vmatpush.bf16.msra.mxu0 0
    %220 = vmatpush.bf16.msra.mxu0 0
    %221 = vmatpush.bf16.msra.mxu0 0
    %222 = vmatpush.bf16.msra.mxu0 0
    %223 = vmatpush.bf16.msra.mxu0 0
    %224 = vmatpush.bf16.msra.mxu0 0
    %225 = vmatpush.bf16.msra.mxu0 %v138
    %226 = vmatpush.bf16.msra.mxu0 %v134
    %227 = vmatmul.bf16.gmra.mxu0 %v150
    %v228 = vpop.f32.mrf.mxu0
    %v229 = vadd.f32 %v82, %v228
    %v230 = vpop.f32.mrf.mxu0
    %v231 = vadd.f32 %v82, %v230
    %232 = vmatmul.bf16.gmra.mxu0 %v153
    %v233 = vpop.f32.mrf.mxu0
    %v234 = vadd.f32 %v82, %v233
    %v235 = vpop.f32.mrf.mxu0
    %v236 = vadd.f32 %v82, %v235
    %237 = vmatmul.bf16.gmra.mxu0 %v156
    %v238 = vpop.f32.mrf.mxu0
    %v239 = vadd.f32 %v82, %v238
    %v240 = vpop.f32.mrf.mxu0
    %v241 = vadd.f32 %v82, %v240
    %242 = vmatmul.bf16.gmra.mxu0 %v159
    %v243 = vpop.f32.mrf.mxu0
    %v244 = vadd.f32 %v82, %v243
    %v245 = vpop.f32.mrf.mxu0
    %v246 = vadd.f32 %v82, %v245
    %247 = vdwg.mxu0
    %248 = vmatpush.bf16.msra.mxu0 0
    %249 = vmatpush.bf16.msra.mxu0 0
    %250 = vmatpush.bf16.msra.mxu0 0
    %251 = vmatpush.bf16.msra.mxu0 0
    %252 = vmatpush.bf16.msra.mxu0 0
    %253 = vmatpush.bf16.msra.mxu0 0
    %254 = vmatpush.bf16.msra.mxu0 %v139
    %255 = vmatpush.bf16.msra.mxu0 %v135
    %256 = vmatmul.bf16.gmra.mxu0 %v150
    %v257 = vpop.f32.mrf.mxu0
    %v258 = vadd.f32 %v83, %v257
    %v259 = vpop.f32.mrf.mxu0
    %v260 = vadd.f32 %v83, %v259
    %261 = vmatmul.bf16.gmra.mxu0 %v153
    %v262 = vpop.f32.mrf.mxu0
    %v263 = vadd.f32 %v83, %v262
    %v264 = vpop.f32.mrf.mxu0
    %v265 = vadd.f32 %v83, %v264
    %266 = vmatmul.bf16.gmra.mxu0 %v156
    %v267 = vpop.f32.mrf.mxu0
    %v268 = vadd.f32 %v83, %v267
    %v269 = vpop.f32.mrf.mxu0
    %v270 = vadd.f32 %v83, %v269
    %271 = vmatmul.bf16.gmra.mxu0 %v159
    %v272 = vpop.f32.mrf.mxu0
    %v273 = vadd.f32 %v83, %v272
    %v274 = vpop.f32.mrf.mxu0
    %v275 = vadd.f32 %v83, %v274
    %276 = vdwg.mxu0
    %vm277 = vcmp.gt.f32.partialorder %v171, 0.0
    %vm278 = vcmp.gt.f32.partialorder %v200, 0.0
    %vm279 = vcmp.gt.f32.partialorder %v229, 0.0
    %vm280 = vcmp.gt.f32.partialorder %v258, 0.0
    %vm281 = vcmp.gt.f32.partialorder %v173, 0.0
    %vm282 = vcmp.gt.f32.partialorder %v202, 0.0
    %vm283 = vcmp.gt.f32.partialorder %v231, 0.0
    %vm284 = vcmp.gt.f32.partialorder %v260, 0.0
    %vm285 = vcmp.gt.f32.partialorder %v176, 0.0
    %vm286 = vcmp.gt.f32.partialorder %v205, 0.0
    %vm287 = vcmp.gt.f32.partialorder %v234, 0.0
    %vm288 = vcmp.gt.f32.partialorder %v263, 0.0
    %vm289 = vcmp.gt.f32.partialorder %v178, 0.0
    %vm290 = vcmp.gt.f32.partialorder %v207, 0.0
    %vm291 = vcmp.gt.f32.partialorder %v236, 0.0
    %vm292 = vcmp.gt.f32.partialorder %v265, 0.0
    %vm293 = vcmp.gt.f32.partialorder %v181, 0.0
    %vm294 = vcmp.gt.f32.partialorder %v210, 0.0
    %vm295 = vcmp.gt.f32.partialorder %v239, 0.0
    %vm296 = vcmp.gt.f32.partialorder %v268, 0.0
    %vm297 = vcmp.gt.f32.partialorder %v183, 0.0
    %vm298 = vcmp.gt.f32.partialorder %v212, 0.0
    %vm299 = vcmp.gt.f32.partialorder %v241, 0.0
    %vm300 = vcmp.gt.f32.partialorder %v270, 0.0
    %vm301 = vcmp.gt.f32.partialorder %v186, 0.0
    %vm302 = vcmp.gt.f32.partialorder %v215, 0.0
    %vm303 = vcmp.gt.f32.partialorder %v244, 0.0
    %vm304 = vcmp.gt.f32.partialorder %v273, 0.0
    %vm305 = vcmp.gt.f32.partialorder %v188, 0.0
    %vm306 = vcmp.gt.f32.partialorder %v217, 0.0
    %vm307 = vcmp.gt.f32.partialorder %v246, 0.0
    %vm308 = vcmp.gt.f32.partialorder %v275, 0.0
    %v309 = vmul.f32 %v171, 0.01
    %v310 = vmul.f32 %v200, 0.01
    %v311 = vmul.f32 %v229, 0.01
    %v312 = vmul.f32 %v258, 0.01
    %v313 = vmul.f32 %v173, 0.01
    %v314 = vmul.f32 %v202, 0.01
    %v315 = vmul.f32 %v231, 0.01
    %v316 = vmul.f32 %v260, 0.01
    %v317 = vmul.f32 %v176, 0.01
    %v318 = vmul.f32 %v205, 0.01
    %v319 = vmul.f32 %v234, 0.01
    %v320 = vmul.f32 %v263, 0.01
    %v321 = vmul.f32 %v178, 0.01
    %v322 = vmul.f32 %v207, 0.01
    %v323 = vmul.f32 %v236, 0.01
    %v324 = vmul.f32 %v265, 0.01
    %v325 = vmul.f32 %v181, 0.01
    %v326 = vmul.f32 %v210, 0.01
    %v327 = vmul.f32 %v239, 0.01
    %v328 = vmul.f32 %v268, 0.01
    %v329 = vmul.f32 %v183, 0.01
    %v330 = vmul.f32 %v212, 0.01
    %v331 = vmul.f32 %v241, 0.01
    %v332 = vmul.f32 %v270, 0.01
    %v333 = vmul.f32 %v186, 0.01
    %v334 = vmul.f32 %v215, 0.01
    %v335 = vmul.f32 %v244, 0.01
    %v336 = vmul.f32 %v273, 0.01
    %v337 = vmul.f32 %v188, 0.01
    %v338 = vmul.f32 %v217, 0.01
    %v339 = vmul.f32 %v246, 0.01
    %v340 = vmul.f32 %v275, 0.01
    %v341 = vsel %vm277, %v171, %v309
    %v342 = vsel %vm278, %v200, %v310
    %v343 = vsel %vm279, %v229, %v311
    %v344 = vsel %vm280, %v258, %v312
    %v345 = vsel %vm281, %v173, %v313
    %v346 = vsel %vm282, %v202, %v314
    %v347 = vsel %vm283, %v231, %v315
    %v348 = vsel %vm284, %v260, %v316
    %v349 = vsel %vm285, %v176, %v317
    %v350 = vsel %vm286, %v205, %v318
    %v351 = vsel %vm287, %v234, %v319
    %v352 = vsel %vm288, %v263, %v320
    %v353 = vsel %vm289, %v178, %v321
    %v354 = vsel %vm290, %v207, %v322
    %v355 = vsel %vm291, %v236, %v323
    %v356 = vsel %vm292, %v265, %v324
    %v357 = vsel %vm293, %v181, %v325
    %v358 = vsel %vm294, %v210, %v326
    %v359 = vsel %vm295, %v239, %v327
    %v360 = vsel %vm296, %v268, %v328
    %v361 = vsel %vm297, %v183, %v329
    %v362 = vsel %vm298, %v212, %v330
    %v363 = vsel %vm299, %v241, %v331
    %v364 = vsel %vm300, %v270, %v332
    %v365 = vsel %vm301, %v186, %v333
    %v366 = vsel %vm302, %v215, %v334
    %v367 = vsel %vm303, %v244, %v335
    %v368 = vsel %vm304, %v273, %v336
    %v369 = vsel %vm305, %v188, %v337
    %v370 = vsel %vm306, %v217, %v338
    %v371 = vsel %vm307, %v246, %v339
    %v372 = vsel %vm308, %v275, %v340
    %v373 = vpack.c.bf16 %v345, %v341
    %v374 = vpack.c.bf16 %v346, %v342
    %v375 = vpack.c.bf16 %v347, %v343
    %v376 = vpack.c.bf16 %v348, %v344
    %v377 = vpack.c.bf16 %v353, %v349
    %v378 = vpack.c.bf16 %v354, %v350
    %v379 = vpack.c.bf16 %v355, %v351
    %v380 = vpack.c.bf16 %v356, %v352
    %v381 = vpack.c.bf16 %v361, %v357
    %v382 = vpack.c.bf16 %v362, %v358
    %v383 = vpack.c.bf16 %v363, %v359
    %v384 = vpack.c.bf16 %v364, %v360
    %v385 = vpack.c.bf16 %v369, %v365
    %v386 = vpack.c.bf16 %v370, %v366
    %v387 = vpack.c.bf16 %v371, %v367
    %v388 = vpack.c.bf16 %v372, %v368
    %v389 = vld [vmem:[#allocation6] sm:$0xf]
    %v390 = vld [vmem:[#allocation6 + $0x4] sm:$0xf]
    %v391 = vld [vmem:[#allocation6 + $0x8] sm:$0xf]
    %v392 = vld [vmem:[#allocation6 + $0xc] sm:$0xf]
    %v393 = vld [vmem:[#allocation6 + $0x10] sm:$0xf]
    %v394 = vld [vmem:[#allocation6 + $0x14] sm:$0xf]
    %v395 = vld [vmem:[#allocation6 + $0x18] sm:$0xf]
    %v396 = vld [vmem:[#allocation6 + $0x1c] sm:$0xf]
    %v397 = vld [vmem:[#allocation6 + $0x20] sm:$0xf]
    %v398 = vld [vmem:[#allocation6 + $0x24] sm:$0xf]
    %v399 = vld [vmem:[#allocation6 + $0x28] sm:$0xf]
    %v400 = vld [vmem:[#allocation6 + $0x2c] sm:$0xf]
    %v401 = vld [vmem:[#allocation6 + $0x30] sm:$0xf]
    %v402 = vld [vmem:[#allocation6 + $0x34] sm:$0xf]
    %v403 = vld [vmem:[#allocation6 + $0x38] sm:$0xf]
    %v404 = vld [vmem:[#allocation6 + $0x3c] sm:$0xf]
    %v405 = vld [vmem:[#allocation6 + $0x40] sm:$0xf]
    %v406 = vld [vmem:[#allocation6 + $0x44] sm:$0xf]
    %v407 = vld [vmem:[#allocation6 + $0x48] sm:$0xf]
    %v408 = vld [vmem:[#allocation6 + $0x4c] sm:$0xf]
    %v409 = vld [vmem:[#allocation6 + $0x50] sm:$0xf]
    %v410 = vld [vmem:[#allocation6 + $0x54] sm:$0xf]
    %v411 = vld [vmem:[#allocation6 + $0x58] sm:$0xf]
    %v412 = vld [vmem:[#allocation6 + $0x5c] sm:$0xf]
    %v413 = vld [vmem:[#allocation6 + $0x60] sm:$0xf]
    %v414 = vld [vmem:[#allocation6 + $0x64] sm:$0xf]
    %v415 = vld [vmem:[#allocation6 + $0x68] sm:$0xf]
    %v416 = vld [vmem:[#allocation6 + $0x6c] sm:$0xf]
    %v417 = vld [vmem:[#allocation6 + $0x70] sm:$0xf]
    %v418 = vld [vmem:[#allocation6 + $0x74] sm:$0xf]
    %v419 = vld [vmem:[#allocation6 + $0x78] sm:$0xf]
    %v420 = vld [vmem:[#allocation6 + $0x7c] sm:$0xf]
    %v421 = vld [vmem:[#allocation6 + $0x80] sm:$0xf]
    %v422 = vld [vmem:[#allocation6 + $0x84] sm:$0xf]
    %v423 = vld [vmem:[#allocation6 + $0x88] sm:$0xf]
    %v424 = vld [vmem:[#allocation6 + $0x8c] sm:$0xf]
    %v425 = vld [vmem:[#allocation6 + $0x90] sm:$0xf]
    %v426 = vld [vmem:[#allocation6 + $0x94] sm:$0xf]
    %v427 = vld [vmem:[#allocation6 + $0x98] sm:$0xf]
    %v428 = vld [vmem:[#allocation6 + $0x9c] sm:$0xf]
    %v429 = vld [vmem:[#allocation6 + $0xa0] sm:$0xf]
    %v430 = vld [vmem:[#allocation6 + $0xa4] sm:$0xf]
    %v431 = vld [vmem:[#allocation6 + $0xa8] sm:$0xf]
    %v432 = vld [vmem:[#allocation6 + $0xac] sm:$0xf]
    %v433 = vld [vmem:[#allocation6 + $0xb0] sm:$0xf]
    %v434 = vld [vmem:[#allocation6 + $0xb4] sm:$0xf]
    %v435 = vld [vmem:[#allocation6 + $0xb8] sm:$0xf]
    %v436 = vld [vmem:[#allocation6 + $0xbc] sm:$0xf]
    %v437 = vld [vmem:[#allocation6 + $0xc0] sm:$0xf]
    %v438 = vld [vmem:[#allocation6 + $0xc4] sm:$0xf]
    %v439 = vld [vmem:[#allocation6 + $0xc8] sm:$0xf]
    %v440 = vld [vmem:[#allocation6 + $0xcc] sm:$0xf]
    %v441 = vld [vmem:[#allocation6 + $0xd0] sm:$0xf]
    %v442 = vld [vmem:[#allocation6 + $0xd4] sm:$0xf]
    %v443 = vld [vmem:[#allocation6 + $0xd8] sm:$0xf]
    %v444 = vld [vmem:[#allocation6 + $0xdc] sm:$0xf]
    %v445 = vld [vmem:[#allocation6 + $0xe0] sm:$0xf]
    %v446 = vld [vmem:[#allocation6 + $0xe4] sm:$0xf]
    %v447 = vld [vmem:[#allocation6 + $0xe8] sm:$0xf]
    %v448 = vld [vmem:[#allocation6 + $0xec] sm:$0xf]
    %v449 = vld [vmem:[#allocation6 + $0xf0] sm:$0xf]
    %v450 = vld [vmem:[#allocation6 + $0xf4] sm:$0xf]
    %v451 = vld [vmem:[#allocation6 + $0xf8] sm:$0xf]
    %v452 = vld [vmem:[#allocation6 + $0xfc] sm:$0xf]
    %v453 = vld [vmem:[%s4] sm:$0x1]
    %v455 = vperm.slane %v453, 0
    %v521 = vunpack.c.l.b16 %v389
    %v522 = vunpack.c.l.b16 %v390
    %v523 = vunpack.c.l.b16 %v391
    %v524 = vunpack.c.l.b16 %v392
    %v525 = vunpack.c.l.b16 %v393
    %v526 = vunpack.c.l.b16 %v394
    %v527 = vunpack.c.l.b16 %v395
    %v528 = vunpack.c.l.b16 %v396
    %v529 = vunpack.c.l.b16 %v397
    %v530 = vunpack.c.l.b16 %v398
    %v531 = vunpack.c.l.b16 %v399
    %v532 = vunpack.c.l.b16 %v400
    %v533 = vunpack.c.l.b16 %v401
    %v534 = vunpack.c.l.b16 %v402
    %v535 = vunpack.c.l.b16 %v403
    %v536 = vunpack.c.l.b16 %v404
    %v537 = vunpack.c.l.b16 %v405
    %v538 = vunpack.c.l.b16 %v406
    %v539 = vunpack.c.l.b16 %v407
    %v540 = vunpack.c.l.b16 %v408
    %v541 = vunpack.c.l.b16 %v409
    %v542 = vunpack.c.l.b16 %v410
    %v543 = vunpack.c.l.b16 %v411
    %v544 = vunpack.c.l.b16 %v412
    %v545 = vunpack.c.l.b16 %v413
    %v546 = vunpack.c.l.b16 %v414
    %v547 = vunpack.c.l.b16 %v415
    %v548 = vunpack.c.l.b16 %v416
    %v549 = vunpack.c.l.b16 %v417
    %v550 = vunpack.c.l.b16 %v418
    %v551 = vunpack.c.l.b16 %v419
    %v552 = vunpack.c.l.b16 %v420
    %v553 = vunpack.c.l.b16 %v421
    %v554 = vunpack.c.l.b16 %v422
    %v555 = vunpack.c.l.b16 %v423
    %v556 = vunpack.c.l.b16 %v424
    %v557 = vunpack.c.l.b16 %v425
    %v558 = vunpack.c.l.b16 %v426
    %v559 = vunpack.c.l.b16 %v427
    %v560 = vunpack.c.l.b16 %v428
    %v561 = vunpack.c.l.b16 %v429
    %v562 = vunpack.c.l.b16 %v430
    %v563 = vunpack.c.l.b16 %v431
    %v564 = vunpack.c.l.b16 %v432
    %v565 = vunpack.c.l.b16 %v433
    %v566 = vunpack.c.l.b16 %v434
    %v567 = vunpack.c.l.b16 %v435
    %v568 = vunpack.c.l.b16 %v436
    %v569 = vunpack.c.l.b16 %v437
    %v570 = vunpack.c.l.b16 %v438
    %v571 = vunpack.c.l.b16 %v439
    %v572 = vunpack.c.l.b16 %v440
    %v573 = vunpack.c.l.b16 %v441
    %v574 = vunpack.c.l.b16 %v442
    %v575 = vunpack.c.l.b16 %v443
    %v576 = vunpack.c.l.b16 %v444
    %v577 = vunpack.c.l.b16 %v445
    %v578 = vunpack.c.l.b16 %v446
    %v579 = vunpack.c.l.b16 %v447
    %v580 = vunpack.c.l.b16 %v448
    %v581 = vunpack.c.l.b16 %v449
    %v582 = vunpack.c.l.b16 %v450
    %v583 = vunpack.c.l.b16 %v451
    %v584 = vunpack.c.l.b16 %v452
    %v585 = vpack.c.b16 %v522, %v521
    %v586 = vpack.c.b16 %v524, %v523
    %v587 = vpack.c.b16 %v526, %v525
    %v588 = vpack.c.b16 %v528, %v527
    %v589 = vpack.c.b16 %v530, %v529
    %v590 = vpack.c.b16 %v532, %v531
    %v591 = vpack.c.b16 %v534, %v533
    %v592 = vpack.c.b16 %v536, %v535
    %v593 = vpack.c.b16 %v538, %v537
    %v594 = vpack.c.b16 %v540, %v539
    %v595 = vpack.c.b16 %v542, %v541
    %v596 = vpack.c.b16 %v544, %v543
    %v597 = vpack.c.b16 %v546, %v545
    %v598 = vpack.c.b16 %v548, %v547
    %v599 = vpack.c.b16 %v550, %v549
    %v600 = vpack.c.b16 %v552, %v551
    %v601 = vpack.c.b16 %v554, %v553
    %v602 = vpack.c.b16 %v556, %v555
    %v603 = vpack.c.b16 %v558, %v557
    %v604 = vpack.c.b16 %v560, %v559
    %v605 = vpack.c.b16 %v562, %v561
    %v606 = vpack.c.b16 %v564, %v563
    %v607 = vpack.c.b16 %v566, %v565
    %v608 = vpack.c.b16 %v568, %v567
    %v609 = vpack.c.b16 %v570, %v569
    %v610 = vpack.c.b16 %v572, %v571
    %v611 = vpack.c.b16 %v574, %v573
    %v612 = vpack.c.b16 %v576, %v575
    %v613 = vpack.c.b16 %v578, %v577
    %v614 = vpack.c.b16 %v580, %v579
    %v615 = vpack.c.b16 %v582, %v581
    %v616 = vpack.c.b16 %v584, %v583
    %649 = vmatpush.bf16.msra.mxu0 %v592
    %650 = vmatpush.bf16.msra.mxu0 %v591
    %651 = vmatpush.bf16.msra.mxu0 %v590
    %652 = vmatpush.bf16.msra.mxu0 %v589
    %653 = vmatpush.bf16.msra.mxu0 %v588
    %654 = vmatpush.bf16.msra.mxu0 %v587
    %655 = vmatpush.bf16.msra.mxu0 %v586
    %656 = vmatpush.bf16.msra.mxu0 %v585
    %657 = vmatmul.bf16.gmra.mxu0 %v373
    %v658 = vpop.f32.mrf.mxu0
    %v659 = vadd.f32 %v455, %v658
    %v660 = vpop.f32.mrf.mxu0
    %v661 = vadd.f32 %v455, %v660
    %662 = vmatmul.bf16.gmra.mxu0 %v377
    %v663 = vpop.f32.mrf.mxu0
    %v664 = vadd.f32 %v455, %v663
    %v665 = vpop.f32.mrf.mxu0
    %v666 = vadd.f32 %v455, %v665
    %667 = vmatmul.bf16.gmra.mxu0 %v381
    %v668 = vpop.f32.mrf.mxu0
    %v669 = vadd.f32 %v455, %v668
    %v670 = vpop.f32.mrf.mxu0
    %v671 = vadd.f32 %v455, %v670
    %672 = vmatmul.bf16.gmra.mxu0 %v385
    %v673 = vpop.f32.mrf.mxu0
    %v674 = vadd.f32 %v455, %v673
    %v675 = vpop.f32.mrf.mxu0
    %v676 = vadd.f32 %v455, %v675
    %677 = vdwg.mxu0
    %678 = vmatpush.bf16.msra.mxu0 %v600
    %679 = vmatpush.bf16.msra.mxu0 %v599
    %680 = vmatpush.bf16.msra.mxu0 %v598
    %681 = vmatpush.bf16.msra.mxu0 %v597
    %682 = vmatpush.bf16.msra.mxu0 %v596
    %683 = vmatpush.bf16.msra.mxu0 %v595
    %684 = vmatpush.bf16.msra.mxu0 %v594
    %685 = vmatpush.bf16.msra.mxu0 %v593
    %686 = vmatmul.bf16.gmra.mxu0 %v374
    %v687 = vpop.f32.mrf.mxu0
    %v688 = vadd.f32 %v659, %v687
    %v689 = vpop.f32.mrf.mxu0
    %v690 = vadd.f32 %v661, %v689
    %691 = vmatmul.bf16.gmra.mxu0 %v378
    %v692 = vpop.f32.mrf.mxu0
    %v693 = vadd.f32 %v664, %v692
    %v694 = vpop.f32.mrf.mxu0
    %v695 = vadd.f32 %v666, %v694
    %696 = vmatmul.bf16.gmra.mxu0 %v382
    %v697 = vpop.f32.mrf.mxu0
    %v698 = vadd.f32 %v669, %v697
    %v699 = vpop.f32.mrf.mxu0
    %v700 = vadd.f32 %v671, %v699
    %701 = vmatmul.bf16.gmra.mxu0 %v386
    %v702 = vpop.f32.mrf.mxu0
    %v703 = vadd.f32 %v674, %v702
    %v704 = vpop.f32.mrf.mxu0
    %v705 = vadd.f32 %v676, %v704
    %706 = vdwg.mxu0
    %707 = vmatpush.bf16.msra.mxu0 %v608
    %708 = vmatpush.bf16.msra.mxu0 %v607
    %709 = vmatpush.bf16.msra.mxu0 %v606
    %710 = vmatpush.bf16.msra.mxu0 %v605
    %711 = vmatpush.bf16.msra.mxu0 %v604
    %712 = vmatpush.bf16.msra.mxu0 %v603
    %713 = vmatpush.bf16.msra.mxu0 %v602
    %714 = vmatpush.bf16.msra.mxu0 %v601
    %715 = vmatmul.bf16.gmra.mxu0 %v375
    %v716 = vpop.f32.mrf.mxu0
    %v717 = vadd.f32 %v688, %v716
    %v718 = vpop.f32.mrf.mxu0
    %v719 = vadd.f32 %v690, %v718
    %720 = vmatmul.bf16.gmra.mxu0 %v379
    %v721 = vpop.f32.mrf.mxu0
    %v722 = vadd.f32 %v693, %v721
    %v723 = vpop.f32.mrf.mxu0
    %v724 = vadd.f32 %v695, %v723
    %725 = vmatmul.bf16.gmra.mxu0 %v383
    %v726 = vpop.f32.mrf.mxu0
    %v727 = vadd.f32 %v698, %v726
    %v728 = vpop.f32.mrf.mxu0
    %v729 = vadd.f32 %v700, %v728
    %730 = vmatmul.bf16.gmra.mxu0 %v387
    %v731 = vpop.f32.mrf.mxu0
    %v732 = vadd.f32 %v703, %v731
    %v733 = vpop.f32.mrf.mxu0
    %v734 = vadd.f32 %v705, %v733
    %735 = vdwg.mxu0
    %736 = vmatpush.bf16.msra.mxu0 %v616
    %737 = vmatpush.bf16.msra.mxu0 %v615
    %738 = vmatpush.bf16.msra.mxu0 %v614
    %739 = vmatpush.bf16.msra.mxu0 %v613
    %740 = vmatpush.bf16.msra.mxu0 %v612
    %741 = vmatpush.bf16.msra.mxu0 %v611
    %742 = vmatpush.bf16.msra.mxu0 %v610
    %743 = vmatpush.bf16.msra.mxu0 %v609
    %744 = vmatmul.bf16.gmra.mxu0 %v376
    %v745 = vpop.f32.mrf.mxu0
    %v746 = vadd.f32 %v717, %v745
    %v747 = vpop.f32.mrf.mxu0
    %v748 = vadd.f32 %v719, %v747
    %749 = vmatmul.bf16.gmra.mxu0 %v380
    %v750 = vpop.f32.mrf.mxu0
    %v751 = vadd.f32 %v722, %v750
    %v752 = vpop.f32.mrf.mxu0
    %v753 = vadd.f32 %v724, %v752
    %754 = vmatmul.bf16.gmra.mxu0 %v384
    %v755 = vpop.f32.mrf.mxu0
    %v756 = vadd.f32 %v727, %v755
    %v757 = vpop.f32.mrf.mxu0
    %v758 = vadd.f32 %v729, %v757
    %759 = vmatmul.bf16.gmra.mxu0 %v388
    %v760 = vpop.f32.mrf.mxu0
    %v761 = vadd.f32 %v732, %v760
    %v762 = vpop.f32.mrf.mxu0
    %v763 = vadd.f32 %v734, %v762
    %764 = vdwg.mxu0
    %vm765 = vcmp.gt.f32.partialorder %v746, 0.0
    %vm766 = vcmp.gt.f32.partialorder %v748, 0.0
    %vm767 = vcmp.gt.f32.partialorder %v751, 0.0
    %vm768 = vcmp.gt.f32.partialorder %v753, 0.0
    %vm769 = vcmp.gt.f32.partialorder %v756, 0.0
    %vm770 = vcmp.gt.f32.partialorder %v758, 0.0
    %vm771 = vcmp.gt.f32.partialorder %v761, 0.0
    %vm772 = vcmp.gt.f32.partialorder %v763, 0.0
    %v773 = vmul.f32 %v746, 0.01
    %v774 = vmul.f32 %v748, 0.01
    %v775 = vmul.f32 %v751, 0.01
    %v776 = vmul.f32 %v753, 0.01
    %v777 = vmul.f32 %v756, 0.01
    %v778 = vmul.f32 %v758, 0.01
    %v779 = vmul.f32 %v761, 0.01
    %v780 = vmul.f32 %v763, 0.01
    %v781 = vsel %vm765, %v746, %v773
    %v782 = vsel %vm766, %v748, %v774
    %v783 = vsel %vm767, %v751, %v775
    %v784 = vsel %vm768, %v753, %v776
    %v785 = vsel %vm769, %v756, %v777
    %v786 = vsel %vm770, %v758, %v778
    %v787 = vsel %vm771, %v761, %v779
    %v788 = vsel %vm772, %v763, %v780
    %v789 = vld [vmem:[%s5] sm:$0x1]
    %v791 = vperm.slane %v789, 0
    %v793 = vmul.f32 %v781, %v791
    %v794 = vmul.f32 %v782, %v791
    %v795 = vmul.f32 %v783, %v791
    %v796 = vmul.f32 %v784, %v791
    %v797 = vmul.f32 %v785, %v791
    %v798 = vmul.f32 %v786, %v791
    %v799 = vmul.f32 %v787, %v791
    %v800 = vmul.f32 %v788, %v791
    %801 = vadd.xlane.f32.xlu0 %v793
    %v802 = vpop.xlane.xlu0 %801
    %803 = vadd.xlane.f32.xlu0 %v794
    %v804 = vpop.xlane.xlu0 %803
    %805 = vadd.xlane.f32.xlu0 %v795
    %v806 = vpop.xlane.xlu0 %805
    %807 = vadd.xlane.f32.xlu0 %v796
    %v808 = vpop.xlane.xlu0 %807
    %809 = vadd.xlane.f32.xlu0 %v797
    %v810 = vpop.xlane.xlu0 %809
    %811 = vadd.xlane.f32.xlu0 %v798
    %v812 = vpop.xlane.xlu0 %811
    %813 = vadd.xlane.f32.xlu0 %v799
    %v814 = vpop.xlane.xlu0 %813
    %815 = vadd.xlane.f32.xlu0 %v800
    %v816 = vpop.xlane.xlu0 %815
    %v817 = vld [vmem:[#allocation2] sm:$0x1]
    %v819 = vperm.slane %v817, 0
    %820 = vset.pattern.permute.xlu0 0
    %821 = vperm.xlu0 %820, %v819
    %v822 = vpop.permute.xlu0 %821
    %v824 = vadd.f32 %v802, %v822
    %v825 = vadd.f32 %v804, %v822
    %v826 = vadd.f32 %v806, %v822
    %v827 = vadd.f32 %v808, %v822
    %v828 = vadd.f32 %v810, %v822
    %v829 = vadd.f32 %v812, %v822
    %v830 = vadd.f32 %v814, %v822
    %v831 = vadd.f32 %v816, %v822
    %v840 = vlaneseq
    %v841 = vand.u32 %v840, 127
    %v842 = vperm.slane %v824, %v841
    %v843 = vperm.slane %v825, %v841
    %v844 = vperm.slane %v826, %v841
    %v845 = vperm.slane %v827, %v841
    %v846 = vperm.slane %v828, %v841
    %v847 = vperm.slane %v829, %v841
    %v848 = vperm.slane %v830, %v841
    %v849 = vperm.slane %v831, %v841
    %vm850 = vcmask 1041409
    %v851 = vsel %vm850, %v843, %v842
    %vm852 = vcmask 1042434
    %v853 = vsel %vm852, %v844, %v851
    %vm854 = vcmask 1043459
    %v855 = vsel %vm854, %v845, %v853
    %vm856 = vcmask 1044484
    %v857 = vsel %vm856, %v846, %v855
    %vm858 = vcmask 1045509
    %v859 = vsel %vm858, %v847, %v857
    %vm860 = vcmask 1046534
    %v861 = vsel %vm860, %v848, %v859
    %vm862 = vcmask 1047559
    %v863 = vsel %vm862, %v849, %v861
    %vm865 = vcmask 64512
    %v866 = vsel %vm865, %v863, -inf
    %867 = vmax.xlane.f32.xlu0 %v866
    %v868 = vpop.xlane.xlu0 %867
    %v870 = vperm.slane %v868, 0
    %v871 = vperm.slane %v868, 1
    %v872 = vperm.slane %v868, 2
    %v873 = vperm.slane %v868, 3
    %v874 = vperm.slane %v868, 4
    %v875 = vperm.slane %v868, 5
    %v876 = vperm.slane %v868, 6
    %v877 = vperm.slane %v868, 7
    %v886 = vsub.f32 %v824, %v870
    %v887 = vsub.f32 %v825, %v871
    %v888 = vsub.f32 %v826, %v872
    %v889 = vsub.f32 %v827, %v873
    %v890 = vsub.f32 %v828, %v874
    %v891 = vsub.f32 %v829, %v875
    %v892 = vsub.f32 %v830, %v876
    %v893 = vsub.f32 %v831, %v877
    %v894 = vmul.f32 %v886, 1.442695
    %v895 = vpow.pop %v894
    %v896 = vmul.f32 %v887, 1.442695
    %v897 = vpow.pop %v896
    %v898 = vmul.f32 %v888, 1.442695
    %v899 = vpow.pop %v898
    %v900 = vmul.f32 %v889, 1.442695
    %v901 = vpow.pop %v900
    %v902 = vmul.f32 %v890, 1.442695
    %v903 = vpow.pop %v902
    %v904 = vmul.f32 %v891, 1.442695
    %v905 = vpow.pop %v904
    %v906 = vmul.f32 %v892, 1.442695
    %v907 = vpow.pop %v906
    %v908 = vmul.f32 %v893, 1.442695
    %v909 = vpow.pop %v908
    %918 = vset.pattern.permute.xlu0 0
    %919 = vperm.xlu0 %918, %v895
    %v920 = vpop.permute.xlu0 %919
    %921 = vset.pattern.permute.xlu0 0
    %922 = vperm.xlu0 %921, %v897
    %v923 = vpop.permute.xlu0 %922
    %924 = vset.pattern.permute.xlu0 0
    %925 = vperm.xlu0 %924, %v899
    %v926 = vpop.permute.xlu0 %925
    %927 = vset.pattern.permute.xlu0 0
    %928 = vperm.xlu0 %927, %v901
    %v929 = vpop.permute.xlu0 %928
    %930 = vset.pattern.permute.xlu0 0
    %931 = vperm.xlu0 %930, %v903
    %v932 = vpop.permute.xlu0 %931
    %933 = vset.pattern.permute.xlu0 0
    %934 = vperm.xlu0 %933, %v905
    %v935 = vpop.permute.xlu0 %934
    %936 = vset.pattern.permute.xlu0 0
    %937 = vperm.xlu0 %936, %v907
    %v938 = vpop.permute.xlu0 %937
    %939 = vset.pattern.permute.xlu0 0
    %940 = vperm.xlu0 %939, %v909
    %v941 = vpop.permute.xlu0 %940
    %v942 = vperm.slane %v920, %v841
    %v943 = vperm.slane %v923, %v841
    %v944 = vperm.slane %v926, %v841
    %v945 = vperm.slane %v929, %v841
    %v946 = vperm.slane %v932, %v841
    %v947 = vperm.slane %v935, %v841
    %v948 = vperm.slane %v938, %v841
    %v949 = vperm.slane %v941, %v841
    %v950 = vsel %vm850, %v943, %v942
    %v951 = vsel %vm852, %v944, %v950
    %v952 = vsel %vm854, %v945, %v951
    %v953 = vsel %vm856, %v946, %v952
    %v954 = vsel %vm858, %v947, %v953
    %v955 = vsel %vm860, %v948, %v954
    %v956 = vsel %vm862, %v949, %v955
    %v958 = vsel %vm865, %v956, 0.0
    %959 = vadd.xlane.f32.xlu0 %v958
    %v960 = vpop.xlane.xlu0 %959
    %v962 = vperm.slane %v960, 0
    %v963 = vperm.slane %v960, 1
    %v964 = vperm.slane %v960, 2
    %v965 = vperm.slane %v960, 3
    %v966 = vperm.slane %v960, 4
    %v967 = vperm.slane %v960, 5
    %v968 = vperm.slane %v960, 6
    %v969 = vperm.slane %v960, 7
    %v978 = vrcp.pop %v962
    %v979 = vmul.f32 %v962, %v978
    %v980 = vsub.f32 1.0, %v979
    %v981 = vmul.f32 %v978, %v980
    %v982 = vadd.f32 %v978, %v981
    %vm983 = vweird.f32 %v962
    %vm984 = vweird.f32 %v978
    %vm985 = vmor %vm983, %vm984
    %v986 = vsel %vm985, %v978, %v982
    %v987 = vand.u32 2147483647, %v962
    %vm988 = vcmp.eq.f32.partialorder %v987, 8.507059e+37
    %v989 = vand.u32 %v962, 2147483648
    %v990 = vor.u32 1.1754944e-38, %v989
    %v991 = vsel %vm988, %v990, %v986
    %v992 = vmul.f32 %v895, %v991
    %v993 = vrcp.pop %v963
    %v994 = vmul.f32 %v963, %v993
    %v995 = vsub.f32 1.0, %v994
    %v996 = vmul.f32 %v993, %v995
    %v997 = vadd.f32 %v993, %v996
    %vm998 = vweird.f32 %v963
    %vm999 = vweird.f32 %v993
    %vm1000 = vmor %vm998, %vm999
    %v1001 = vsel %vm1000, %v993, %v997
    %v1002 = vand.u32 2147483647, %v963
    %vm1003 = vcmp.eq.f32.partialorder %v1002, 8.507059e+37
    %v1004 = vand.u32 %v963, 2147483648
    %v1005 = vor.u32 1.1754944e-38, %v1004
    %v1006 = vsel %vm1003, %v1005, %v1001
    %v1007 = vmul.f32 %v897, %v1006
    %v1008 = vrcp.pop %v964
    %v1009 = vmul.f32 %v964, %v1008
    %v1010 = vsub.f32 1.0, %v1009
    %v1011 = vmul.f32 %v1008, %v1010
    %v1012 = vadd.f32 %v1008, %v1011
    %vm1013 = vweird.f32 %v964
    %vm1014 = vweird.f32 %v1008
    %vm1015 = vmor %vm1013, %vm1014
    %v1016 = vsel %vm1015, %v1008, %v1012
    %v1017 = vand.u32 2147483647, %v964
    %vm1018 = vcmp.eq.f32.partialorder %v1017, 8.507059e+37
    %v1019 = vand.u32 %v964, 2147483648
    %v1020 = vor.u32 1.1754944e-38, %v1019
    %v1021 = vsel %vm1018, %v1020, %v1016
    %v1022 = vmul.f32 %v899, %v1021
    %v1023 = vrcp.pop %v965
    %v1024 = vmul.f32 %v965, %v1023
    %v1025 = vsub.f32 1.0, %v1024
    %v1026 = vmul.f32 %v1023, %v1025
    %v1027 = vadd.f32 %v1023, %v1026
    %vm1028 = vweird.f32 %v965
    %vm1029 = vweird.f32 %v1023
    %vm1030 = vmor %vm1028, %vm1029
    %v1031 = vsel %vm1030, %v1023, %v1027
    %v1032 = vand.u32 2147483647, %v965
    %vm1033 = vcmp.eq.f32.partialorder %v1032, 8.507059e+37
    %v1034 = vand.u32 %v965, 2147483648
    %v1035 = vor.u32 1.1754944e-38, %v1034
    %v1036 = vsel %vm1033, %v1035, %v1031
    %v1037 = vmul.f32 %v901, %v1036
    %v1038 = vrcp.pop %v966
    %v1039 = vmul.f32 %v966, %v1038
    %v1040 = vsub.f32 1.0, %v1039
    %v1041 = vmul.f32 %v1038, %v1040
    %v1042 = vadd.f32 %v1038, %v1041
    %vm1043 = vweird.f32 %v966
    %vm1044 = vweird.f32 %v1038
    %vm1045 = vmor %vm1043, %vm1044
    %v1046 = vsel %vm1045, %v1038, %v1042
    %v1047 = vand.u32 2147483647, %v966
    %vm1048 = vcmp.eq.f32.partialorder %v1047, 8.507059e+37
    %v1049 = vand.u32 %v966, 2147483648
    %v1050 = vor.u32 1.1754944e-38, %v1049
    %v1051 = vsel %vm1048, %v1050, %v1046
    %v1052 = vmul.f32 %v903, %v1051
    %v1053 = vrcp.pop %v967
    %v1054 = vmul.f32 %v967, %v1053
    %v1055 = vsub.f32 1.0, %v1054
    %v1056 = vmul.f32 %v1053, %v1055
    %v1057 = vadd.f32 %v1053, %v1056
    %vm1058 = vweird.f32 %v967
    %vm1059 = vweird.f32 %v1053
    %vm1060 = vmor %vm1058, %vm1059
    %v1061 = vsel %vm1060, %v1053, %v1057
    %v1062 = vand.u32 2147483647, %v967
    %vm1063 = vcmp.eq.f32.partialorder %v1062, 8.507059e+37
    %v1064 = vand.u32 %v967, 2147483648
    %v1065 = vor.u32 1.1754944e-38, %v1064
    %v1066 = vsel %vm1063, %v1065, %v1061
    %v1067 = vmul.f32 %v905, %v1066
    %v1068 = vrcp.pop %v968
    %v1069 = vmul.f32 %v968, %v1068
    %v1070 = vsub.f32 1.0, %v1069
    %v1071 = vmul.f32 %v1068, %v1070
    %v1072 = vadd.f32 %v1068, %v1071
    %vm1073 = vweird.f32 %v968
    %vm1074 = vweird.f32 %v1068
    %vm1075 = vmor %vm1073, %vm1074
    %v1076 = vsel %vm1075, %v1068, %v1072
    %v1077 = vand.u32 2147483647, %v968
    %vm1078 = vcmp.eq.f32.partialorder %v1077, 8.507059e+37
    %v1079 = vand.u32 %v968, 2147483648
    %v1080 = vor.u32 1.1754944e-38, %v1079
    %v1081 = vsel %vm1078, %v1080, %v1076
    %v1082 = vmul.f32 %v907, %v1081
    %v1083 = vrcp.pop %v969
    %v1084 = vmul.f32 %v969, %v1083
    %v1085 = vsub.f32 1.0, %v1084
    %v1086 = vmul.f32 %v1083, %v1085
    %v1087 = vadd.f32 %v1083, %v1086
    %vm1088 = vweird.f32 %v969
    %vm1089 = vweird.f32 %v1083
    %vm1090 = vmor %vm1088, %vm1089
    %v1091 = vsel %vm1090, %v1083, %v1087
    %v1092 = vand.u32 2147483647, %v969
    %vm1093 = vcmp.eq.f32.partialorder %v1092, 8.507059e+37
    %v1094 = vand.u32 %v969, 2147483648
    %v1095 = vor.u32 1.1754944e-38, %v1094
    %v1096 = vsel %vm1093, %v1095, %v1091
    %v1097 = vmul.f32 %v909, %v1096
    %1106 = vset.pattern.permute.xlu0 0
    %1107 = vperm.xlu0 %1106, %v992
    %v1108 = vpop.permute.xlu0 %1107
    %1109 = vset.pattern.permute.xlu0 0
    %1110 = vperm.xlu0 %1109, %v1007
    %v1111 = vpop.permute.xlu0 %1110
    %1112 = vset.pattern.permute.xlu0 0
    %1113 = vperm.xlu0 %1112, %v1022
    %v1114 = vpop.permute.xlu0 %1113
    %1115 = vset.pattern.permute.xlu0 0
    %1116 = vperm.xlu0 %1115, %v1037
    %v1117 = vpop.permute.xlu0 %1116
    %1118 = vset.pattern.permute.xlu0 0
    %1119 = vperm.xlu0 %1118, %v1052
    %v1120 = vpop.permute.xlu0 %1119
    %1121 = vset.pattern.permute.xlu0 0
    %1122 = vperm.xlu0 %1121, %v1067
    %v1123 = vpop.permute.xlu0 %1122
    %1124 = vset.pattern.permute.xlu0 0
    %1125 = vperm.xlu0 %1124, %v1082
    %v1126 = vpop.permute.xlu0 %1125
    %1127 = vset.pattern.permute.xlu0 0
    %1128 = vperm.xlu0 %1127, %v1097
    %v1129 = vpop.permute.xlu0 %1128
    %v1130 = vperm.slane %v1108, %v841
    %v1131 = vperm.slane %v1111, %v841
    %v1132 = vperm.slane %v1114, %v841
    %v1133 = vperm.slane %v1117, %v841
    %v1134 = vperm.slane %v1120, %v841
    %v1135 = vperm.slane %v1123, %v841
    %v1136 = vperm.slane %v1126, %v841
    %v1137 = vperm.slane %v1129, %v841
    %v1138 = vsel %vm850, %v1131, %v1130
    %v1139 = vsel %vm852, %v1132, %v1138
    %v1140 = vsel %vm854, %v1133, %v1139
    %v1141 = vsel %vm856, %v1134, %v1140
    %v1142 = vsel %vm858, %v1135, %v1141
    %v1143 = vsel %vm860, %v1136, %v1142
    %v1144 = vsel %vm862, %v1137, %v1143
    %1146 = vst.msk [vmem:[#allocation8] sm:$0xff] %vm865, %v1144
    // Predicated region
    $region38: #{tpu_custom_call.1} parent=1 // pred_check
      _
    $region39: #{tpu_custom_call.1} parent=1 // pred_check_branch
      %1148 = sbr.rel (0) target = $region41
    $region40: #{tpu_custom_call.1} parent=1 // pred_region
      %1150 = vsyncadd [#allocation5], 0
      %s1152 = sshll.u32 [#allocation8], 4
      %s1153 = int_to_ptr.vmem [resolvable:$true] %s1152
      %s1154 = sshll.u32 %s7, 4
      %s1155 = int_to_ptr.hbm [resolvable:$true] %s1154
      %1157 = dma.vmem_to_hbm [thread:$0]  %s1153, 128, %s1155, [#allocation5]
    $region41: #{tpu_custom_call.1} parent=1 // pred_fallthru
      _
    // Predicated region
    $region42: #{tpu_custom_call.1} parent=1 // pred_check
      _
    $region43: #{tpu_custom_call.1} parent=1 // pred_check_branch
      %1159 = sbr.rel (0) target = $region45
    $region44: #{tpu_custom_call.1} parent=1 // pred_region
      %1161 = dma.done [#allocation5], 128
    $region45: #{tpu_custom_call.1} parent=1 // pred_fallthru
      _
    %1162 = vsyncpa [#allocation4], 1
    %1163 = vsyncpa [#allocation7], 1
    %1164 = vsyncpa [#allocation5], 1

</llo_original>
